<compile_context>
chip_gen: v6e
topology: v6e:2x2x1
jax: 0.10.0
libtpu: 0.0.40
codegen_flags: <defaults>
</compile_context>

<pallas_src>
import functools

import jax
import jax.numpy as jnp
from jax.experimental import pallas as pl
from jax.experimental.pallas import tpu as pltpu


def _warp_kernel(C, TK, kmin_ref, kmax_ref, idx_ref, w_ref, img_ref,
                 out_ref, acc_ref):
    """One (batch, q-tile, k-tile) grid step.

    kmin_ref/kmax_ref : (N, nq) int32 SMEM -- K-block range touched per q-tile
    idx_ref : (1, 1, TQ)  int32   -- flat index of the top-left tap (y0*W + x0)
    w_ref   : (1, 4, TQ)  f32     -- bilinear weights (wa, wb, wc, wd)
    img_ref : (1, 4C, TK) f32/bf16 -- K-slice of [img, roll(-W), roll(-1), roll(-(W+1))]
    out_ref : (1, C, TQ)  f32
    acc_ref : (C, TQ)     f32 scratch accumulator
    """
    b = pl.program_id(0)
    qi = pl.program_id(1)
    k = pl.program_id(2)
    nk = pl.num_programs(2)

    @pl.when(k == 0)
    def _():
        acc_ref[...] = jnp.zeros_like(acc_ref)

    kmin = kmin_ref[b, qi]
    kmax = kmax_ref[b, qi]

    @pl.when(jnp.logical_and(k >= kmin, k <= kmax))
    def _():
        # One-hot gather block for source rows [k*TK, (k+1)*TK):
        #   M[r, p] = (k*TK + r == idx_a[p])
        # built via a (TK,1) vs (1,TQ) broadcast compare (no (TK,TQ) iota temp).
        idx_local = idx_ref[0] - k * TK                        # (1, TQ) int32
        row = jax.lax.broadcasted_iota(jnp.int32, (TK, 1), 0)  # (TK, 1)
        onehot = (row == idx_local).astype(img_ref.dtype)      # (TK, TQ)

        # Lane-dense MXU gather of all four taps at once:
        # rows [s*C:(s+1)*C] of g hold the s-th tap values.
        g = jnp.dot(img_ref[0], onehot,
                    preferred_element_type=jnp.float32)        # (4C, TQ)

        w = w_ref[0]                                           # (4, TQ)
        acc_ref[...] += (w[0:1] * g[0 * C:1 * C]
                         + w[1:2] * g[1 * C:2 * C]
                         + w[2:3] * g[2 * C:3 * C]
                         + w[3:4] * g[3 * C:4 * C])

    @pl.when(k == nk - 1)
    def _():
        out_ref[0] = acc_ref[...].astype(out_ref.dtype)


def _round_up(x, m):
    return (x + m - 1) // m * m


def _pick_tq(HW):
    """Output-pixel tile: lane-dense multiple of 128; prefer 256/512 (wide MXU)."""
    for tq in (512, 256, 128):
        if HW % tq == 0:
            return tq
    if HW >= 4096:
        return 512
    if HW >= 1024:
        return 256
    return 128


def _pick_tk(HW):
    """Contraction (source-pixel) tile streamed through VMEM."""
    for tk in (1024, 512, 256, 128):
        if HW % tk == 0:
            return tk
    if HW >= 8192:
        return 1024
    if HW >= 2048:
        return 512
    return 128


def backward_warp(inp, flow, *, use_bf16=False):
    """inp: (N, C, H, W) f32, flow: (N, 2, H, W) f32 -> (N, C, H, W) f32.

    Matches the PyTorch Backward_warp module.  Note: taps whose bilinear
    weight is exactly zero (clamped borders / padding) read arbitrary values;
    if the input contains Inf/NaN those 0 * non-finite products may differ
    from a clamped-gather reference.
    """
    N, C, H, W = inp.shape
    HW = H * W

    # ---- O(HW) coordinate / weight prep (lane-dense, plain JAX) ----
    gx = jnp.broadcast_to(jnp.arange(W, dtype=jnp.float32)[None, :], (H, W))
    gy = jnp.broadcast_to(jnp.arange(H, dtype=jnp.float32)[:, None], (H, W))
    x = jnp.clip((gx[None] + flow[:, 0]).reshape(N, HW), 0.0, float(W - 1))
    y = jnp.clip((gy[None] + flow[:, 1]).reshape(N, HW), 0.0, float(H - 1))
    x0_f = jnp.floor(x)
    y0_f = jnp.floor(y)
    x1_f = x0_f + 1.0
    y1_f = y0_f + 1.0
    x0 = x0_f.astype(jnp.int32)
    y0 = y0_f.astype(jnp.int32)

    idx_a = y0 * W + x0                                    # (N, HW) top-left tap
    wa = (x1_f - x) * (y1_f - y)
    wb = (x1_f - x) * (y - y0_f)
    wc = (x - x0_f) * (y1_f - y)
    wd = (x - x0_f) * (y - y0_f)
    wts = jnp.stack([wa, wb, wc, wd], axis=1).astype(jnp.float32)  # (N, 4, HW)

    # ---- tiling / padding (all tiles lane-dense multiples of 128) ----
    TQ = _pick_tq(HW)
    TK = _pick_tk(HW)
    HW_q = _round_up(HW, TQ)     # padded number of output pixels
    HW_k = _round_up(HW, TK)     # padded number of source pixels
    nq = HW_q // TQ
    nk = HW_k // TK

    # Padded output pixels: idx edge-replicated (keeps the K-block skip tight),
    # weights zero (they contribute nothing and are sliced off at the end).
    idx_pad = jnp.pad(idx_a, ((0, 0), (0, HW_q - HW)), mode="edge")
    wts_pad = jnp.pad(wts, ((0, 0), (0, 0), (0, HW_q - HW)))
    idx_pad3 = idx_pad.reshape(N, 1, HW_q)

    # Per-(batch, q-tile) range of source K blocks actually touched (scalar prefetch).
    idx_blk = idx_pad.reshape(N, nq, TQ) // TK
    kmin_blk = jnp.min(idx_blk, axis=2).astype(jnp.int32)   # (N, nq)
    kmax_blk = jnp.max(idx_blk, axis=2).astype(jnp.int32)   # (N, nq)

    # ---- image: NCHW-flat, zero-padded on the source axis, plus three shifted
    # copies for taps b/c/d, built with ONE concatenate in (a, b, c, d) order.
    compute_dtype = jnp.bfloat16 if use_bf16 else jnp.float32
    img = jnp.pad(inp.reshape(N, C, HW).astype(jnp.float32),
                  ((0, 0), (0, 0), (0, HW_k - HW))).astype(compute_dtype)
    # TODO(synk): for very small C the 4x image stack dominates HBM traffic;
    # could instead ship (N, C, HW) and do the three shifts in-kernel with
    # pltpu.roll plus a (W+1)-element halo on each K tile.
    img_stack = jnp.concatenate(
        [img,
         jnp.roll(img, -W, axis=2),          # tap b: (y1, x0)
         jnp.roll(img, -1, axis=2),          # tap c: (y0, x1)
         jnp.roll(img, -(W + 1), axis=2)],   # tap d: (y1, x1)
        axis=1)                              # (N, 4C, HW_k)

    cost = pl.CostEstimate(
        flops=2 * N * (4 * C) * HW_k * HW_q + 8 * N * C * HW_q * nk,
        transcendentals=0,
        bytes_accessed=4 * N * (4 * C * HW_k + 5 * HW_q + C * HW_q))

    out = pl.pallas_call(
        functools.partial(_warp_kernel, C, TK),
        out_shape=jax.ShapeDtypeStruct((N, C, HW_q), jnp.float32),
        grid_spec=pltpu.PrefetchScalarGridSpec(
            num_scalar_prefetch=2,
            grid=(N, nq, nk),
            in_specs=[
                pl.BlockSpec((1, 1, TQ), lambda b, qi, k, kmn, kmx: (b, 0, qi)),
                pl.BlockSpec((1, 4, TQ), lambda b, qi, k, kmn, kmx: (b, 0, qi)),
                # Stream only the K blocks a q-tile actually touches; the clamp
                # makes out-of-range K steps revisit the same block (repeated
                # block index => the DMA is skipped).
                pl.BlockSpec(
                    (1, 4 * C, TK),
                    lambda b, qi, k, kmn, kmx: (
                        b, 0, jnp.clip(k, kmn[b, qi], kmx[b, qi]))),
            ],
            out_specs=pl.BlockSpec(
                (1, C, TQ), lambda b, qi, k, kmn, kmx: (b, 0, qi)),
            scratch_shapes=[pltpu.VMEM((C, TQ), jnp.float32)],
        ),
        compiler_params=pltpu.CompilerParams(
            dimension_semantics=("parallel", "parallel", "arbitrary")),
        cost_estimate=cost,
    )(kmin_blk, kmax_blk, idx_pad3, wts_pad, img_stack)

    # (N, C, HW_q) is already NCHW flattened over space: drop padding, reshape.
    return out[:, :, :HW].reshape(N, C, H, W)


def _reference_warp(inp, flow):
    """Pure-JAX reference reproducing the PyTorch semantics (for verification)."""
    N, C, H, W = inp.shape
    gx = jnp.broadcast_to(jnp.arange(W, dtype=jnp.float32)[None, :], (H, W))
    gy = jnp.broadcast_to(jnp.arange(H, dtype=jnp.float32)[:, None], (H, W))
    x = (gx[None] + flow[:, 0]).reshape(-1)
    y = (gy[None] + flow[:, 1]).reshape(-1)
    x = jnp.clip(x, 0.0, W - 1.0)
    y = jnp.clip(y, 0.0, H - 1.0)
    x0_f, y0_f = jnp.floor(x), jnp.floor(y)
    x1_f, y1_f = x0_f + 1.0, y0_f + 1.0
    x0 = x0_f.astype(jnp.int32)
    y0 = y0_f.astype(jnp.int32)
    x1 = jnp.clip(x1_f, 0.0, W - 1.0).astype(jnp.int32)
    y1 = jnp.clip(y1_f, 0.0, H - 1.0).astype(jnp.int32)
    base = jnp.repeat(jnp.arange(N, dtype=jnp.int32) * (H * W), H * W)
    img_flat = jnp.transpose(inp, (0, 2, 3, 1)).reshape(-1, C)
    Ia = img_flat[base + y0 * W + x0]
    Ib = img_flat[base + y1 * W + x0]
    Ic = img_flat[base + y0 * W + x1]
    Id = img_flat[base + y1 * W + x1]
    wa = ((x1_f - x) * (y1_f - y))[:, None]
    wb = ((x1_f - x) * (y - y0_f))[:, None]
    wc = ((x - x0_f) * (y1_f - y))[:, None]
    wd = ((x - x0_f) * (y - y0_f))[:, None]
    out = wa * Ia + wb * Ib + wc * Ic + wd * Id
    return jnp.transpose(out.reshape(N, H, W, C), (0, 3, 1, 2))


if __name__ == "__main__":
    key = jax.random.PRNGKey(0)
    k1, k2 = jax.random.split(key)

    N, C, H, W = 2, 4, 16, 16
    x = jax.random.normal(k1, (N, C, H, W), dtype=jnp.float32)
    # flow of a few pixels in each direction
    flow = 3.0 * jax.random.normal(k2, (N, 2, H, W), dtype=jnp.float32)

    out = backward_warp(x, flow)
    out = jax.block_until_ready(out)

    ref = jax.block_until_ready(_reference_warp(x, flow))
    assert out.shape == (N, C, H, W)
    assert jnp.allclose(out, ref, atol=1e-5, rtol=1e-5)

    print("KERNEL_OK")
</pallas_src>

<mosaic_0001>
module attributes {stable_mosaic.version = 11 : i64} {
  func.func @_warp_kernel(%arg0: i32, %arg1: i32, %arg2: i32, %arg3: memref<2x1xi32, #tpu.memory_space<smem>>, %arg4: memref<2x1xi32, #tpu.memory_space<smem>>, %arg5: memref<1x1x256xi32, #tpu.memory_space<vmem>>, %arg6: memref<1x4x256xf32, #tpu.memory_space<vmem>>, %arg7: memref<1x16x256xf32, #tpu.memory_space<vmem>>, %arg8: memref<1x4x256xf32, #tpu.memory_space<vmem>>, %arg9: memref<4x256xf32, #tpu.memory_space<vmem>>) attributes {dimension_semantics = [#tpu.dimension_semantics<parallel>, #tpu.dimension_semantics<parallel>, #tpu.dimension_semantics<arbitrary>], iteration_bounds = array<i64: 2, 1, 1>, scalar_prefetch = 2 : i64, scratch_operands = 1 : i64, tpu.core_type = #tpu.core_type<tc>, window_params = [{transform_indices = @transform_0, window_bounds = array<i64: 1, 1, 256>}, {transform_indices = @transform_1, window_bounds = array<i64: 1, 4, 256>}, {transform_indices = @transform_2, window_bounds = array<i64: 1, 16, 256>}, {transform_indices = @transform_3, window_bounds = array<i64: 1, 4, 256>}]} {
    %c0_i32 = arith.constant 0 : i32
    %0 = arith.cmpi eq, %arg2, %c0_i32 : i32
    %1 = arith.extui %0 : i1 to i32
    %c0_i32_0 = arith.constant 0 : i32
    %2 = arith.cmpi ne, %1, %c0_i32_0 : i32
    scf.if %2 {
      %cst = arith.constant 0.000000e+00 : f32
      %17 = vector.broadcast %cst : f32 to vector<4x256xf32>
      %c0 = arith.constant 0 : index
      %c0_4 = arith.constant 0 : index
      %18 = vector.load %arg9[%c0, %c0_4] : memref<4x256xf32, #tpu.memory_space<vmem>>, vector<4x256xf32>
      tpu.vector_store %arg9[%c0, %c0_4], %17 {strides = array<i32>} : memref<4x256xf32, #tpu.memory_space<vmem>>, vector<4x256xf32>,
    } else {
    }
    %3 = arith.index_cast %arg0 : i32 to index
    %4 = arith.index_cast %arg1 : i32 to index
    %5 = memref.load %arg3[%3, %4] : memref<2x1xi32, #tpu.memory_space<smem>>
    %6 = arith.index_cast %arg0 : i32 to index
    %7 = arith.index_cast %arg1 : i32 to index
    %8 = memref.load %arg4[%6, %7] : memref<2x1xi32, #tpu.memory_space<smem>>
    %9 = arith.cmpi sge, %arg2, %5 : i32
    %10 = arith.cmpi sle, %arg2, %8 : i32
    %11 = arith.andi %9, %10 : i1
    %12 = arith.extui %11 : i1 to i32
    %c0_i32_1 = arith.constant 0 : i32
    %13 = arith.cmpi ne, %12, %c0_i32_1 : i32
    scf.if %13 {
      %c0 = arith.constant 0 : index
      %c0_4 = arith.constant 0 : index
      %c0_5 = arith.constant 0 : index
      %17 = vector.load %arg5[%c0, %c0_4, %c0_5] : memref<1x1x256xi32, #tpu.memory_space<vmem>>, vector<1x1x256xi32>
      %18 = vector.shape_cast %17 : vector<1x1x256xi32> to vector<1x256xi32>
      %c256_i32 = arith.constant 256 : i32
      %19 = arith.muli %arg2, %c256_i32 : i32
      %20 = vector.broadcast %19 : i32 to vector<1x256xi32>
      %21 = arith.subi %18, %20 : vector<1x256xi32>
      %22 = tpu.iota {dimensions = array<i32: 0>} : vector<256x1xi32>
      %23 = vector.broadcast %22 : vector<256x1xi32> to vector<256x256xi32>
      %24 = vector.broadcast %21 : vector<1x256xi32> to vector<256x256xi32>
      %25 = arith.cmpi eq, %23, %24 : vector<256x256xi32>
      %26 = arith.extui %25 : vector<256x256xi1> to vector<256x256xi32>
      %27 = arith.sitofp %26 : vector<256x256xi32> to vector<256x256xf32>
      %c0_6 = arith.constant 0 : index
      %c0_7 = arith.constant 0 : index
      %c0_8 = arith.constant 0 : index
      %28 = vector.load %arg7[%c0_6, %c0_7, %c0_8] : memref<1x16x256xf32, #tpu.memory_space<vmem>>, vector<1x16x256xf32>
      %29 = vector.shape_cast %28 : vector<1x16x256xf32> to vector<16x256xf32>
      %cst = arith.constant dense<0.000000e+00> : vector<16x256xf32>
      %30 = tpu.matmul %29, %27, %cst {dimension_numbers = #tpu.dot_dimension_numbers<[1], [0], [0], [1], [0, 0, 1, 1], [], []>} : vector<16x256xf32>, vector<256x256xf32>, vector<16x256xf32> -> vector<16x256xf32>
      %c0_9 = arith.constant 0 : index
      %c0_10 = arith.constant 0 : index
      %c0_11 = arith.constant 0 : index
      %31 = vector.load %arg6[%c0_9, %c0_10, %c0_11] : memref<1x4x256xf32, #tpu.memory_space<vmem>>, vector<1x4x256xf32>
      %32 = vector.shape_cast %31 : vector<1x4x256xf32> to vector<4x256xf32>
      %c0_12 = arith.constant 0 : index
      %c0_13 = arith.constant 0 : index
      %33 = vector.load %arg9[%c0_12, %c0_13] : memref<4x256xf32, #tpu.memory_space<vmem>>, vector<4x256xf32>
      %34 = vector.extract_strided_slice %32 {offsets = [0, 0], sizes = [1, 256], strides = [1, 1]} : vector<4x256xf32> to vector<1x256xf32>
      %35 = vector.extract_strided_slice %30 {offsets = [0, 0], sizes = [4, 256], strides = [1, 1]} : vector<16x256xf32> to vector<4x256xf32>
      %36 = vector.broadcast %34 : vector<1x256xf32> to vector<4x256xf32>
      %37 = arith.mulf %36, %35 : vector<4x256xf32>
      %38 = vector.extract_strided_slice %32 {offsets = [1, 0], sizes = [1, 256], strides = [1, 1]} : vector<4x256xf32> to vector<1x256xf32>
      %39 = vector.extract_strided_slice %30 {offsets = [4, 0], sizes = [4, 256], strides = [1, 1]} : vector<16x256xf32> to vector<4x256xf32>
      %40 = vector.broadcast %38 : vector<1x256xf32> to vector<4x256xf32>
      %41 = arith.mulf %40, %39 : vector<4x256xf32>
      %42 = arith.addf %37, %41 : vector<4x256xf32>
      %43 = vector.extract_strided_slice %32 {offsets = [2, 0], sizes = [1, 256], strides = [1, 1]} : vector<4x256xf32> to vector<1x256xf32>
      %44 = vector.extract_strided_slice %30 {offsets = [8, 0], sizes = [4, 256], strides = [1, 1]} : vector<16x256xf32> to vector<4x256xf32>
      %45 = vector.broadcast %43 : vector<1x256xf32> to vector<4x256xf32>
      %46 = arith.mulf %45, %44 : vector<4x256xf32>
      %47 = arith.addf %42, %46 : vector<4x256xf32>
      %48 = vector.extract_strided_slice %32 {offsets = [3, 0], sizes = [1, 256], strides = [1, 1]} : vector<4x256xf32> to vector<1x256xf32>
      %49 = vector.extract_strided_slice %30 {offsets = [12, 0], sizes = [4, 256], strides = [1, 1]} : vector<16x256xf32> to vector<4x256xf32>
      %50 = vector.broadcast %48 : vector<1x256xf32> to vector<4x256xf32>
      %51 = arith.mulf %50, %49 : vector<4x256xf32>
      %52 = arith.addf %47, %51 : vector<4x256xf32>
      %53 = arith.addf %33, %52 : vector<4x256xf32>
      %c0_14 = arith.constant 0 : index
      %c0_15 = arith.constant 0 : index
      %54 = vector.load %arg9[%c0_14, %c0_15] : memref<4x256xf32, #tpu.memory_space<vmem>>, vector<4x256xf32>
      tpu.vector_store %arg9[%c0_14, %c0_15], %53 {strides = array<i32>} : memref<4x256xf32, #tpu.memory_space<vmem>>, vector<4x256xf32>,
    } else {
    }
    %c0_i32_2 = arith.constant 0 : i32
    %14 = arith.cmpi eq, %arg2, %c0_i32_2 : i32
    %15 = arith.extui %14 : i1 to i32
    %c0_i32_3 = arith.constant 0 : i32
    %16 = arith.cmpi ne, %15, %c0_i32_3 : i32
    scf.if %16 {
      %c0 = arith.constant 0 : index
      %c0_4 = arith.constant 0 : index
      %17 = vector.load %arg9[%c0, %c0_4] : memref<4x256xf32, #tpu.memory_space<vmem>>, vector<4x256xf32>
      %c0_5 = arith.constant 0 : index
      %c0_6 = arith.constant 0 : index
      %c0_7 = arith.constant 0 : index
      %18 = vector.load %arg8[%c0_5, %c0_6, %c0_7] : memref<1x4x256xf32, #tpu.memory_space<vmem>>, vector<1x4x256xf32>
      %19 = vector.shape_cast %18 : vector<1x4x256xf32> to vector<4x256xf32>
      %20 = vector.shape_cast %17 : vector<4x256xf32> to vector<1x4x256xf32>
      tpu.vector_store %arg8[%c0_5, %c0_6, %c0_7], %20 {strides = array<i32>} : memref<1x4x256xf32, #tpu.memory_space<vmem>>, vector<1x4x256xf32>,
    } else {
    }
    return
  }
  func.func @transform_0(%arg0: i32, %arg1: i32, %arg2: i32, %arg3: memref<2x1xi32, #tpu.memory_space<smem>>, %arg4: memref<2x1xi32, #tpu.memory_space<smem>>) -> (i32, i32, i32) {
    %c0_i32 = arith.constant 0 : i32
    %c0_i32_0 = arith.constant 0 : i32
    return %arg0, %c0_i32, %arg1 : i32, i32, i32
  }
  func.func @transform_1(%arg0: i32, %arg1: i32, %arg2: i32, %arg3: memref<2x1xi32, #tpu.memory_space<smem>>, %arg4: memref<2x1xi32, #tpu.memory_space<smem>>) -> (i32, i32, i32) {
    %c0_i32 = arith.constant 0 : i32
    %c0_i32_0 = arith.constant 0 : i32
    return %arg0, %c0_i32, %arg1 : i32, i32, i32
  }
  func.func @transform_2(%arg0: i32, %arg1: i32, %arg2: i32, %arg3: memref<2x1xi32, #tpu.memory_space<smem>>, %arg4: memref<2x1xi32, #tpu.memory_space<smem>>) -> (i32, i32, i32) {
    %0 = arith.index_cast %arg0 : i32 to index
    %1 = arith.index_cast %arg1 : i32 to index
    %2 = memref.load %arg3[%0, %1] : memref<2x1xi32, #tpu.memory_space<smem>>
    %3 = arith.index_cast %arg0 : i32 to index
    %4 = arith.index_cast %arg1 : i32 to index
    %5 = memref.load %arg4[%3, %4] : memref<2x1xi32, #tpu.memory_space<smem>>
    %6 = arith.maxsi %2, %arg2 : i32
    %7 = arith.minsi %5, %6 : i32
    %c0_i32 = arith.constant 0 : i32
    %c0_i32_0 = arith.constant 0 : i32
    return %arg0, %c0_i32, %7 : i32, i32, i32
  }
  func.func @transform_3(%arg0: i32, %arg1: i32, %arg2: i32, %arg3: memref<2x1xi32, #tpu.memory_space<smem>>, %arg4: memref<2x1xi32, #tpu.memory_space<smem>>) -> (i32, i32, i32) {
    %c0_i32 = arith.constant 0 : i32
    %c0_i32_0 = arith.constant 0 : i32
    return %arg0, %c0_i32, %arg1 : i32, i32, i32
  }
}

</mosaic_0001>

<llo_original>
// kernel: tpu_custom_call.1
$region0: #{tpu_custom_call.1}
  #allocation0 [shape = 'u32[]', space=smem, size = 0x4, offset = 0x4, fixed_abs, tag = 'smem constant byte address 0x4 - core index']
  #allocation1 [shape = 'u32[144,128]{1,0:T(1,128)}', space=vmem, size = 0x12000, scoped, tag = 'internal scratch']
  #allocation2 [shape = 'f32[4,256]{1,0:T(4,128)}', space=vmem, size = 0x1000, scoped, tag = 'scratch operand']
  #allocation3 [shape = 's32[1]{0}', space=sflag, size = 0x4, scoped, tag = 'scoped memory for tpu_custom_call.1']
  #allocation4 [shape = 'u8[1024]{0}', space=smem, size = 0x400, scoped, tag = 'prefetched SMEM operand 0']
  #allocation5 [shape = 'u8[1024]{0}', space=smem, size = 0x400, scoped, tag = 'prefetched SMEM operand 1']
  %s0 = inlined_call_operand.vmem [shape: s32[2,1], index: 0, kind: input, shape index: {}]
  %s1 = inlined_call_operand.vmem [shape: s32[2,1], index: 1, kind: input, shape index: {}]
  %s2 = inlined_call_operand.vmem [shape: s32[2,1,256], index: 2, kind: input, shape index: {}]
  %s3 = inlined_call_operand.hbm [shape: f32[2,4,256], index: 3, kind: input, shape index: {}]
  %s4 = inlined_call_operand.hbm [shape: f32[2,16,256], index: 4, kind: input, shape index: {}]
  %s5 = inlined_call_operand.hbm [shape: f32[2,4,256], index: 5, kind: output, shape index: {}]
  %s6 = sld [smem:[#allocation0]]
  $region65: #{tpu_custom_call.1} parent=0
    _
  %s8 = ssub.s32 1, %s6
  %s9 = scalar_select 0, %s8, %s6
  %s10 = sshll.u32 %s0, 4
  %s11 = int_to_ptr.vmem [resolvable:$true] %s10
  %13 = dma.vmem_to_smem %s11, 32, [#allocation4], [#allocation3]
  %s14 = sshll.u32 %s1, 4
  %s15 = int_to_ptr.vmem [resolvable:$true] %s14
  %17 = dma.vmem_to_smem %s15, 32, [#allocation5], [#allocation3]
  %18 = dma.done [#allocation3], 64
  %19 = sfence
  $region1: #{tpu_custom_call.1} parent=0
    #allocation6 [shape = 'u8[8192]{0}', space=vmem, size = 0x2000, scoped, tag = 'input window, operand 3']
    #allocation7 [shape = 's32[2]{0}', space=sflag, size = 0x8, scoped, tag = 'scoped memory for tpu_custom_call.1']
    #allocation8 [shape = 's32[2]{0}', space=sflag, size = 0x8, scoped, tag = 'scoped memory for tpu_custom_call.1']
    #allocation9 [shape = 'u8[32768]{0}', space=vmem, size = 0x8000, scoped, tag = 'input window, operand 4']
    #allocation10 [shape = 's32[2]{0}', space=sflag, size = 0x8, scoped, tag = 'scoped memory for tpu_custom_call.1']
    #allocation11 [shape = 'u8[8192]{0}', space=vmem, size = 0x2000, scoped, tag = 'output window, operand 0']
    %20 = vsyncpa [#allocation7], 0
    %s21 = scalar_lea.sflag [#allocation7], 1
    %22 = vsyncpa %s21, 0
    %23 = vsyncpa [#allocation10], 0
    %s24 = scalar_lea.sflag [#allocation10], 1
    %25 = vsyncpa %s24, 0
    %26 = vsyncpa [#allocation8], 0
    %s27 = scalar_lea.sflag [#allocation8], 1
    %28 = vsyncpa %s27, 0
    loop: start=0, step=1, limit=4
    $region2: #{tpu_custom_call.1} parent=1 // loop_pre_header
      _
    $region3: #{tpu_custom_call.1} parent=1 // loop_header
      %s30 = sphi 0, %s34
      %p31 = scmp.ge.s32.totalorder %s30, 4
      %s37 = sphi 0, %s56
      %s38 = sphi 0, %s52
      %s39 = sphi 0, %s48
      %s40 = sphi 0, %s37
      %s41 = sphi 0, %s38
      %s42 = sphi 0, %s39
      %s43 = sphi 0, %s40
      %s44 = sphi 0, %s41
      %s45 = sphi 0, %s42
      %s61 = sphi 0, %s63
      %s64 = sphi 0, %s61
      %s65 = sphi 0, %s64
      %s81 = sphi 0, %s65
      %s89 = sphi 0, %s91
      %s92 = sphi 0, %s89
      %s93 = sphi 0, %s92
      %s109 = sphi 0, %s93
      %s143 = sphi 0, %s145
      %s146 = sphi 0, %s143
      %s147 = sphi 0, %s146
      %s163 = sphi 0, %s147
      %s171 = sphi 0, %s173
      %s174 = sphi 0, %s171
      %s175 = sphi 0, %s174
      %s191 = sphi 0, %s175
    $region4: #{tpu_custom_call.1} parent=1 // loop_header_branch
      %33 = sbr.rel (%p31) target = $region8
    $region5: #{tpu_custom_call.1} parent=1 // loop_body
      %s35 = ssub.s32 %s30, 1
      %s36 = ssub.s32 %s30, 2
      %s46 = sadd.s32 1, %s39
      %p47 = scmp.ge.s32.totalorder %s46, 1
      %s48 = scalar_select %p47, 0, %s46
      %s49 = sadd.s32 1, %s38
      %s50 = scalar_select %p47, %s49, %s38
      %p51 = scmp.ge.s32.totalorder %s50, 1
      %s52 = scalar_select %p51, 0, %s50
      %s53 = sadd.s32 1, %s37
      %s54 = scalar_select %p51, %s53, %s37
      %p55 = scmp.ge.s32.totalorder %s54, 2
      %s56 = scalar_select %p55, 0, %s54
      %s57 = ssub.s32 %s37, %s56
      %s58 = ssub.s32 %s38, %s52
      %s59 = sor.u32 %s57, %s58
      %p60 = scmp.eq.s32.totalorder %s59, 0
      %s62 = sadd.s32 %s61, 1
      %s63 = scalar_select %p60, %s61, %s62
      %p66 = pneg %p60
      %p67 = scmp.eq.s32.totalorder %s30, 1
      %p68 = por %p66, %p67
      %p69 = scmp.ne.s32.totalorder %s61, %s64
      %p70 = scmp.eq.s32.totalorder %s30, 0
      %p71 = por %p69, %p70
      %p72 = scmp.ne.s32.totalorder %s61, %s64
      %p73 = scmp.eq.s32.totalorder %s35, 1
      %p74 = por %p72, %p73
      %p75 = scmp.ne.s32.totalorder %s64, %s65
      %p76 = scmp.eq.s32.totalorder %s35, 0
      %p77 = por %p75, %p76
      %p78 = scmp.ne.s32.totalorder %s64, %s65
      %p79 = scmp.eq.s32.totalorder %s36, 1
      %p80 = por %p78, %p79
      %p82 = scmp.ne.s32.totalorder %s65, %s81
      %p83 = scmp.eq.s32.totalorder %s36, 0
      %p84 = por %p82, %p83
      %s85 = ssub.s32 %s37, %s56
      %s86 = ssub.s32 %s38, %s52
      %s87 = sor.u32 %s85, %s86
      %p88 = scmp.eq.s32.totalorder %s87, 0
      %s90 = sadd.s32 %s89, 1
      %s91 = scalar_select %p88, %s89, %s90
      %p94 = pneg %p88
      %p95 = scmp.eq.s32.totalorder %s30, 1
      %p96 = por %p94, %p95
      %p97 = scmp.ne.s32.totalorder %s89, %s92
      %p98 = scmp.eq.s32.totalorder %s30, 0
      %p99 = por %p97, %p98
      %p100 = scmp.ne.s32.totalorder %s89, %s92
      %p101 = scmp.eq.s32.totalorder %s35, 1
      %p102 = por %p100, %p101
      %p103 = scmp.ne.s32.totalorder %s92, %s93
      %p104 = scmp.eq.s32.totalorder %s35, 0
      %p105 = por %p103, %p104
      %p106 = scmp.ne.s32.totalorder %s92, %s93
      %p107 = scmp.eq.s32.totalorder %s36, 1
      %p108 = por %p106, %p107
      %p110 = scmp.ne.s32.totalorder %s93, %s109
      %p111 = scmp.eq.s32.totalorder %s36, 0
      %p112 = por %p110, %p111
      %s113 = sshra.s32 %s38, 7
      %s114 = sand.u32 %s38, 127
      %s115 = sadd.s32 %s113, %s37
      %s116 = smul.u32 %s115, 128
      %s117 = sshra.s32 %s38, 7
      %s118 = sand.u32 %s38, 127
      %s119 = sadd.s32 %s116, %s118
      %s120 = sld [smem:[#allocation4 + %s119]]
      %s121 = sld [smem:[#allocation5 + %s119]]
      %p122 = scmp.gt.s32.totalorder %s120, %s39
      %s123 = scalar_select %p122, %s120, %s39
      %p124 = scmp.lt.s32.totalorder %s121, %s123
      %s125 = scalar_select %p124, %s121, %s123
      %s126 = sshra.s32 %s52, 7
      %s127 = sand.u32 %s52, 127
      %s128 = sadd.s32 %s126, %s56
      %s129 = smul.u32 %s128, 128
      %s130 = sshra.s32 %s52, 7
      %s131 = sand.u32 %s52, 127
      %s132 = sadd.s32 %s129, %s131
      %s133 = sld [smem:[#allocation4 + %s132]]
      %s134 = sld [smem:[#allocation5 + %s132]]
      %p135 = scmp.gt.s32.totalorder %s133, %s48
      %s136 = scalar_select %p135, %s133, %s48
      %p137 = scmp.lt.s32.totalorder %s134, %s136
      %s138 = scalar_select %p137, %s134, %s136
      %s139 = ssub.s32 %s37, %s56
      %s140 = ssub.s32 %s125, %s138
      %s141 = sor.u32 %s139, %s140
      %p142 = scmp.eq.s32.totalorder %s141, 0
      %s144 = sadd.s32 %s143, 1
      %s145 = scalar_select %p142, %s143, %s144
      %p148 = pneg %p142
      %p149 = scmp.eq.s32.totalorder %s30, 1
      %p150 = por %p148, %p149
      %p151 = scmp.ne.s32.totalorder %s143, %s146
      %p152 = scmp.eq.s32.totalorder %s30, 0
      %p153 = por %p151, %p152
      %p154 = scmp.ne.s32.totalorder %s143, %s146
      %p155 = scmp.eq.s32.totalorder %s35, 1
      %p156 = por %p154, %p155
      %p157 = scmp.ne.s32.totalorder %s146, %s147
      %p158 = scmp.eq.s32.totalorder %s35, 0
      %p159 = por %p157, %p158
      %p160 = scmp.ne.s32.totalorder %s146, %s147
      %p161 = scmp.eq.s32.totalorder %s36, 1
      %p162 = por %p160, %p161
      %p164 = scmp.ne.s32.totalorder %s147, %s163
      %p165 = scmp.eq.s32.totalorder %s36, 0
      %p166 = por %p164, %p165
      %s167 = ssub.s32 %s37, %s56
      %s168 = ssub.s32 %s38, %s52
      %s169 = sor.u32 %s167, %s168
      %p170 = scmp.eq.s32.totalorder %s169, 0
      %s172 = sadd.s32 %s171, 1
      %s173 = scalar_select %p170, %s171, %s172
      %p176 = pneg %p170
      %p177 = scmp.eq.s32.totalorder %s30, 1
      %p178 = por %p176, %p177
      %p179 = scmp.ne.s32.totalorder %s171, %s174
      %p180 = scmp.eq.s32.totalorder %s30, 0
      %p181 = por %p179, %p180
      %p182 = scmp.ne.s32.totalorder %s171, %s174
      %p183 = scmp.eq.s32.totalorder %s35, 1
      %p184 = por %p182, %p183
      %p185 = scmp.ne.s32.totalorder %s174, %s175
      %p186 = scmp.eq.s32.totalorder %s35, 0
      %p187 = por %p185, %p186
      %p188 = scmp.ne.s32.totalorder %s174, %s175
      %p189 = scmp.eq.s32.totalorder %s36, 1
      %p190 = por %p188, %p189
      %p192 = scmp.ne.s32.totalorder %s175, %s191
      %p193 = scmp.eq.s32.totalorder %s36, 0
      %p194 = por %p192, %p193
      %p195 = scmp.le.s32.totalorder 1, %s30
      %p196 = scmp.lt.s32.totalorder %s30, 3
      %p197 = pnand %p195, %p196
      %p198 = pneg %p197
      // Predicated region
      $region9: #{tpu_custom_call.1} parent=5 // pred_check
        _
      $region10: #{tpu_custom_call.1} parent=5 // pred_check_branch
        %200 = sbr.rel (%p197) target = $region12
      $region11: #{tpu_custom_call.1} parent=5 // pred_region
        %s201 = ssub.s32 %s30, 1
      $region12: #{tpu_custom_call.1} parent=5 // pred_fallthru
        _
      %p202 = scmp.lt.s32.totalorder %s30, 2
      // Predicated region
      $region13: #{tpu_custom_call.1} parent=5 // pred_check
        %p203 = pneg %p202
      $region14: #{tpu_custom_call.1} parent=5 // pred_check_branch
        %205 = sbr.rel (%p203) target = $region16
      $region15: #{tpu_custom_call.1} parent=5 // pred_region
        // Predicated region
        $region17: #{tpu_custom_call.1} parent=15 // pred_check
          %p206 = pneg %p71
        $region18: #{tpu_custom_call.1} parent=15 // pred_check_branch
          %208 = sbr.rel (%p206) target = $region20
        $region19: #{tpu_custom_call.1} parent=15 // pred_region
          %s209 = smul.u32 2, %s38
          %p210 = scmp.lt.s32.totalorder %s37, 1
          %s211 = scalar_select %p210, %s37, 1
          %p212 = scmp.lt.s32.totalorder %s209, 1
          %s213 = scalar_select %p212, %s209, 1
          %s214 = smul.addr %s211, 2
          %s215 = sadd.s32 %s213, %s214
          %s216 = scalar_lea.vmem %s2, %s215
          %s217 = smul.u32 2, %s38
        $region20: #{tpu_custom_call.1} parent=15 // pred_fallthru
          _
        // Predicated region
        $region21: #{tpu_custom_call.1} parent=15 // pred_check
          %p218 = pneg %p99
        $region22: #{tpu_custom_call.1} parent=15 // pred_check_branch
          %220 = sbr.rel (%p218) target = $region24
        $region23: #{tpu_custom_call.1} parent=15 // pred_region
          %s221 = sand.u32 %s89, 1
          %s222 = scalar_lea.sflag [#allocation7], %s221
          %s223 = sand.u32 %s89, 1
          %s224 = smul.addr %s223, 8
          %s225 = scalar_lea.vmem [#allocation6], %s224
          %s226 = smul.u32 2, %s38
          %s228 = ssub.s32 128, 128
          %229 = vsyncadd %s222, %s228
          %s230 = smul.addr %s37, 2
          %s231 = sadd.s32 %s226, %s230
          %s232 = smul.addr %s231, 64
          %s233 = scalar_lea.hbm %s3, %s232
          %s235 = sshll.u32 %s225, 4
          %s236 = int_to_ptr.vmem [resolvable:$true] %s235
          %238 = dma.hbm_to_vmem [thread:$0]  %s233, 128, %s236, %s222
        $region24: #{tpu_custom_call.1} parent=15 // pred_fallthru
          _
        // Predicated region
        $region25: #{tpu_custom_call.1} parent=15 // pred_check
          %p239 = pneg %p153
        $region26: #{tpu_custom_call.1} parent=15 // pred_check_branch
          %241 = sbr.rel (%p239) target = $region28
        $region27: #{tpu_custom_call.1} parent=15 // pred_region
          %s242 = sand.u32 %s143, 1
          %s243 = scalar_lea.sflag [#allocation10], %s242
          %s244 = sand.u32 %s143, 1
          %s245 = smul.addr %s244, 32
          %s246 = scalar_lea.vmem [#allocation9], %s245
          %s247 = sshra.s32 %s38, 7
          %s248 = sand.u32 %s38, 127
          %s249 = sadd.s32 %s247, %s37
          %s250 = smul.u32 %s249, 128
          %s251 = sshra.s32 %s38, 7
          %s252 = sand.u32 %s38, 127
          %s253 = sadd.s32 %s250, %s252
          %s254 = sld [smem:[#allocation4 + %s253]]
          %s255 = sld [smem:[#allocation5 + %s253]]
          %p256 = scmp.gt.s32.totalorder %s254, %s39
          %s257 = scalar_select %p256, %s254, %s39
          %p258 = scmp.lt.s32.totalorder %s255, %s257
          %s259 = scalar_select %p258, %s255, %s257
          %s260 = smul.u32 2, %s259
          %s262 = ssub.s32 512, 512
          %263 = vsyncadd %s243, %s262
          %s264 = smul.addr %s37, 4
          %s265 = sadd.s32 %s260, %s264
          %s266 = smul.addr %s265, 128
          %s267 = scalar_lea.hbm %s4, %s266
          %s268 = sshll.u32 %s246, 4
          %s269 = int_to_ptr.vmem [resolvable:$true] %s268
          %274 = dma.hbm_to_vmem [thread:$0]  %s267, 512, %s269, %s243, 256, 256, 16
        $region28: #{tpu_custom_call.1} parent=15 // pred_fallthru
          _
      $region16: #{tpu_custom_call.1} parent=5 // pred_fallthru
        _
      %p275 = scmp.le.s32.totalorder 1, %s30
      %p276 = scmp.lt.s32.totalorder %s30, 3
      %p277 = pnand %p275, %p276
      %p278 = pneg %p277
      // Predicated region
      $region29: #{tpu_custom_call.1} parent=5 // pred_check
        _
      $region30: #{tpu_custom_call.1} parent=5 // pred_check_branch
        %280 = sbr.rel (%p277) target = $region32
      $region31: #{tpu_custom_call.1} parent=5 // pred_region
        %s281 = ssub.s32 %s30, 1
        %s282 = sand.u32 %s92, 1
        %s283 = scalar_lea.sflag [#allocation7], %s282
        %s284 = sand.u32 %s92, 1
        %s285 = smul.addr %s284, 8
        %s286 = scalar_lea.vmem [#allocation6], %s285
        // Predicated region
        $region33: #{tpu_custom_call.1} parent=31 // pred_check
          %p287 = pneg %p105
        $region34: #{tpu_custom_call.1} parent=31 // pred_check_branch
          %289 = sbr.rel (%p287) target = $region36
        $region35: #{tpu_custom_call.1} parent=31 // pred_region
          %290 = dma.done %s283, 128
        $region36: #{tpu_custom_call.1} parent=31 // pred_fallthru
          _
        %s291 = sand.u32 %s146, 1
        %s292 = scalar_lea.sflag [#allocation10], %s291
        %s293 = sand.u32 %s146, 1
        %s294 = smul.addr %s293, 32
        %s295 = scalar_lea.vmem [#allocation9], %s294
        // Predicated region
        $region37: #{tpu_custom_call.1} parent=31 // pred_check
          %p296 = pneg %p159
        $region38: #{tpu_custom_call.1} parent=31 // pred_check_branch
          %298 = sbr.rel (%p296) target = $region40
        $region39: #{tpu_custom_call.1} parent=31 // pred_region
          %299 = dma.done %s292, 512
        $region40: #{tpu_custom_call.1} parent=31 // pred_fallthru
          _
        %s300 = smul.u32 2, %s41
        %p301 = scmp.lt.s32.totalorder %s40, 1
        %s302 = scalar_select %p301, %s40, 1
        %p303 = scmp.lt.s32.totalorder %s300, 1
        %s304 = scalar_select %p303, %s300, 1
        %s305 = smul.addr %s302, 2
        %s306 = sadd.s32 %s304, %s305
        %s307 = scalar_lea.vmem %s2, %s306
        %p308 = pneg %p77
        %p309 = pneg %p74
        %s310 = sand.u32 %s92, 1
        %s311 = scalar_lea.sflag [#allocation7], %s310
        %s312 = sand.u32 %s92, 1
        %s313 = smul.addr %s312, 8
        %s314 = scalar_lea.vmem [#allocation6], %s313
        %p315 = pneg %p105
        %p316 = pneg %p102
        %s317 = sand.u32 %s146, 1
        %s318 = scalar_lea.sflag [#allocation10], %s317
        %s319 = sand.u32 %s146, 1
        %s320 = smul.addr %s319, 32
        %s321 = scalar_lea.vmem [#allocation9], %s320
        %p322 = pneg %p159
        %p323 = pneg %p156
        %p324 = pneg %p187
        %p325 = pneg %p184
        %s326 = sand.u32 %s174, 1
        %s327 = scalar_lea.sflag [#allocation8], %s326
        %s328 = sand.u32 %s174, 1
        %s329 = smul.addr %s328, 8
        %s330 = scalar_lea.vmem [#allocation11], %s329
        %s331 = smul.u32 2, %s41
        %p332 = scmp.lt.s32.totalorder %s40, 1
        %s333 = scalar_select %p332, %s40, 1
        %p334 = scmp.lt.s32.totalorder %s331, 1
        %s335 = scalar_select %p334, %s331, 1
        %s336 = smul.addr %s333, 2
        %s337 = sadd.s32 %s335, %s336
        %s338 = scalar_lea.vmem %s2, %s337
        %s339 = smul.u32 2, %s41
        %s340 = smul.u32 2, %s41
        %s341 = sshra.s32 %s41, 7
        %s342 = sand.u32 %s41, 127
        %s343 = sadd.s32 %s341, %s40
        %s344 = smul.u32 %s343, 128
        %s345 = sshra.s32 %s41, 7
        %s346 = sand.u32 %s41, 127
        %s347 = sadd.s32 %s344, %s346
        %s348 = sld [smem:[#allocation4 + %s347]]
        %s349 = sld [smem:[#allocation5 + %s347]]
        %p350 = scmp.gt.s32.totalorder %s348, %s42
        %s351 = scalar_select %p350, %s348, %s42
        %p352 = scmp.lt.s32.totalorder %s349, %s351
        %s353 = scalar_select %p352, %s349, %s351
        %s354 = smul.u32 2, %s353
        %s355 = smul.u32 2, %s41
        %p356 = scmp.eq.s32.totalorder %s42, 0
        // Predicated region
        $region41: #{tpu_custom_call.1} parent=31 // pred_check
          %p357 = pneg %p356
        $region42: #{tpu_custom_call.1} parent=31 // pred_check_branch
          %359 = sbr.rel (%p357) target = $region44
        $region43: #{tpu_custom_call.1} parent=31 // pred_region
          %360 = vst [vmem:[#allocation2] sm:$0xff] 0.0
        $region44: #{tpu_custom_call.1} parent=31 // pred_fallthru
          _
        %s361 = sshra.s32 %s41, 7
        %s362 = sand.u32 %s41, 127
        %s363 = sadd.s32 %s361, %s40
        %s364 = smul.u32 %s363, 128
        %s365 = sshra.s32 %s41, 7
        %s366 = sand.u32 %s41, 127
        %s367 = sadd.s32 %s364, %s366
        %s368 = sld [smem:[#allocation4 + %s367]]
        %s369 = sld [smem:[#allocation5 + %s367]]
        %p370 = scmp.ge.s32.totalorder %s42, %s368
        %p371 = scmp.le.s32.totalorder %s42, %s369
        %p372 = pnand %p370, %p371
        %p373 = pneg %p372
        // Predicated region
        $region45: #{tpu_custom_call.1} parent=31 // pred_check
          _
        $region46: #{tpu_custom_call.1} parent=31 // pred_check_branch
          %375 = sbr.rel (%p372) target = $region48
        $region47: #{tpu_custom_call.1} parent=31 // pred_region
          %v376 = vld [vmem:[%s338] sm:$0x3]
          %s377 = smul.u32 %s42, 256
          %v378 = vstv %s377
          %v379 = vsub.s32 %v376, %v378
          %v380 = vlaneseq
          %v381 = vshrl.u32 %v380, 7
          %v382 = vadd.s32 %v381, 8
          %v383 = vadd.s32 %v381, 16
          %v384 = vadd.s32 %v381, 24
          %v385 = vadd.s32 %v381, 32
          %v386 = vadd.s32 %v381, 40
          %v387 = vadd.s32 %v381, 48
          %v388 = vadd.s32 %v381, 56
          %v389 = vadd.s32 %v381, 64
          %v390 = vadd.s32 %v381, 72
          %v391 = vadd.s32 %v381, 80
          %v392 = vadd.s32 %v381, 88
          %v393 = vadd.s32 %v381, 96
          %v394 = vadd.s32 %v381, 104
          %v395 = vadd.s32 %v381, 112
          %v396 = vadd.s32 %v381, 120
          %v397 = vadd.s32 %v381, 128
          %v398 = vadd.s32 %v381, 136
          %v399 = vadd.s32 %v381, 144
          %v400 = vadd.s32 %v381, 152
          %v401 = vadd.s32 %v381, 160
          %v402 = vadd.s32 %v381, 168
          %v403 = vadd.s32 %v381, 176
          %v404 = vadd.s32 %v381, 184
          %v405 = vadd.s32 %v381, 192
          %v406 = vadd.s32 %v381, 200
          %v407 = vadd.s32 %v381, 208
          %v408 = vadd.s32 %v381, 216
          %v409 = vadd.s32 %v381, 224
          %v410 = vadd.s32 %v381, 232
          %v411 = vadd.s32 %v381, 240
          %v412 = vadd.s32 %v381, 248
          %v413 = vlaneseq
          %v414 = vshrl.u32 %v413, 7
          %v415 = vsub.s32 0, %v414
          %v416 = vrot.slane %v379, %v415
          %v417 = vlaneseq
          %v418 = vshrl.u32 %v417, 7
          %v419 = vsub.s32 1, %v418
          %v420 = vrot.slane %v379, %v419
          %vm421 = vcmp.eq.s32.totalorder %v381, %v416
          %vm422 = vcmp.eq.s32.totalorder %v381, %v420
          %vm423 = vcmp.eq.s32.totalorder %v382, %v416
          %vm424 = vcmp.eq.s32.totalorder %v382, %v420
          %vm425 = vcmp.eq.s32.totalorder %v383, %v416
          %vm426 = vcmp.eq.s32.totalorder %v383, %v420
          %vm427 = vcmp.eq.s32.totalorder %v384, %v416
          %vm428 = vcmp.eq.s32.totalorder %v384, %v420
          %vm429 = vcmp.eq.s32.totalorder %v385, %v416
          %vm430 = vcmp.eq.s32.totalorder %v385, %v420
          %vm431 = vcmp.eq.s32.totalorder %v386, %v416
          %vm432 = vcmp.eq.s32.totalorder %v386, %v420
          %vm433 = vcmp.eq.s32.totalorder %v387, %v416
          %vm434 = vcmp.eq.s32.totalorder %v387, %v420
          %vm435 = vcmp.eq.s32.totalorder %v388, %v416
          %vm436 = vcmp.eq.s32.totalorder %v388, %v420
          %vm437 = vcmp.eq.s32.totalorder %v389, %v416
          %vm438 = vcmp.eq.s32.totalorder %v389, %v420
          %vm439 = vcmp.eq.s32.totalorder %v390, %v416
          %vm440 = vcmp.eq.s32.totalorder %v390, %v420
          %vm441 = vcmp.eq.s32.totalorder %v391, %v416
          %vm442 = vcmp.eq.s32.totalorder %v391, %v420
          %vm443 = vcmp.eq.s32.totalorder %v392, %v416
          %vm444 = vcmp.eq.s32.totalorder %v392, %v420
          %vm445 = vcmp.eq.s32.totalorder %v393, %v416
          %vm446 = vcmp.eq.s32.totalorder %v393, %v420
          %vm447 = vcmp.eq.s32.totalorder %v394, %v416
          %vm448 = vcmp.eq.s32.totalorder %v394, %v420
          %vm449 = vcmp.eq.s32.totalorder %v395, %v416
          %vm450 = vcmp.eq.s32.totalorder %v395, %v420
          %vm451 = vcmp.eq.s32.totalorder %v396, %v416
          %vm452 = vcmp.eq.s32.totalorder %v396, %v420
          %vm453 = vcmp.eq.s32.totalorder %v397, %v416
          %vm454 = vcmp.eq.s32.totalorder %v397, %v420
          %vm455 = vcmp.eq.s32.totalorder %v398, %v416
          %vm456 = vcmp.eq.s32.totalorder %v398, %v420
          %vm457 = vcmp.eq.s32.totalorder %v399, %v416
          %vm458 = vcmp.eq.s32.totalorder %v399, %v420
          %vm459 = vcmp.eq.s32.totalorder %v400, %v416
          %vm460 = vcmp.eq.s32.totalorder %v400, %v420
          %vm461 = vcmp.eq.s32.totalorder %v401, %v416
          %vm462 = vcmp.eq.s32.totalorder %v401, %v420
          %vm463 = vcmp.eq.s32.totalorder %v402, %v416
          %vm464 = vcmp.eq.s32.totalorder %v402, %v420
          %vm465 = vcmp.eq.s32.totalorder %v403, %v416
          %vm466 = vcmp.eq.s32.totalorder %v403, %v420
          %vm467 = vcmp.eq.s32.totalorder %v404, %v416
          %vm468 = vcmp.eq.s32.totalorder %v404, %v420
          %vm469 = vcmp.eq.s32.totalorder %v405, %v416
          %vm470 = vcmp.eq.s32.totalorder %v405, %v420
          %vm471 = vcmp.eq.s32.totalorder %v406, %v416
          %vm472 = vcmp.eq.s32.totalorder %v406, %v420
          %vm473 = vcmp.eq.s32.totalorder %v407, %v416
          %vm474 = vcmp.eq.s32.totalorder %v407, %v420
          %vm475 = vcmp.eq.s32.totalorder %v408, %v416
          %vm476 = vcmp.eq.s32.totalorder %v408, %v420
          %vm477 = vcmp.eq.s32.totalorder %v409, %v416
          %vm478 = vcmp.eq.s32.totalorder %v409, %v420
          %vm479 = vcmp.eq.s32.totalorder %v410, %v416
          %vm480 = vcmp.eq.s32.totalorder %v410, %v420
          %vm481 = vcmp.eq.s32.totalorder %v411, %v416
          %vm482 = vcmp.eq.s32.totalorder %v411, %v420
          %vm483 = vcmp.eq.s32.totalorder %v412, %v416
          %vm484 = vcmp.eq.s32.totalorder %v412, %v420
          %v485 = vsel %vm421, 1, 0
          %v486 = vsel %vm422, 1, 0
          %v487 = vsel %vm423, 1, 0
          %v488 = vsel %vm424, 1, 0
          %v489 = vsel %vm425, 1, 0
          %v490 = vsel %vm426, 1, 0
          %v491 = vsel %vm427, 1, 0
          %v492 = vsel %vm428, 1, 0
          %v493 = vsel %vm429, 1, 0
          %v494 = vsel %vm430, 1, 0
          %v495 = vsel %vm431, 1, 0
          %v496 = vsel %vm432, 1, 0
          %v497 = vsel %vm433, 1, 0
          %v498 = vsel %vm434, 1, 0
          %v499 = vsel %vm435, 1, 0
          %v500 = vsel %vm436, 1, 0
          %v501 = vsel %vm437, 1, 0
          %v502 = vsel %vm438, 1, 0
          %v503 = vsel %vm439, 1, 0
          %v504 = vsel %vm440, 1, 0
          %v505 = vsel %vm441, 1, 0
          %v506 = vsel %vm442, 1, 0
          %v507 = vsel %vm443, 1, 0
          %v508 = vsel %vm444, 1, 0
          %v509 = vsel %vm445, 1, 0
          %v510 = vsel %vm446, 1, 0
          %v511 = vsel %vm447, 1, 0
          %v512 = vsel %vm448, 1, 0
          %v513 = vsel %vm449, 1, 0
          %v514 = vsel %vm450, 1, 0
          %v515 = vsel %vm451, 1, 0
          %v516 = vsel %vm452, 1, 0
          %v517 = vsel %vm453, 1, 0
          %v518 = vsel %vm454, 1, 0
          %v519 = vsel %vm455, 1, 0
          %v520 = vsel %vm456, 1, 0
          %v521 = vsel %vm457, 1, 0
          %v522 = vsel %vm458, 1, 0
          %v523 = vsel %vm459, 1, 0
          %v524 = vsel %vm460, 1, 0
          %v525 = vsel %vm461, 1, 0
          %v526 = vsel %vm462, 1, 0
          %v527 = vsel %vm463, 1, 0
          %v528 = vsel %vm464, 1, 0
          %v529 = vsel %vm465, 1, 0
          %v530 = vsel %vm466, 1, 0
          %v531 = vsel %vm467, 1, 0
          %v532 = vsel %vm468, 1, 0
          %v533 = vsel %vm469, 1, 0
          %v534 = vsel %vm470, 1, 0
          %v535 = vsel %vm471, 1, 0
          %v536 = vsel %vm472, 1, 0
          %v537 = vsel %vm473, 1, 0
          %v538 = vsel %vm474, 1, 0
          %v539 = vsel %vm475, 1, 0
          %v540 = vsel %vm476, 1, 0
          %v541 = vsel %vm477, 1, 0
          %v542 = vsel %vm478, 1, 0
          %v543 = vsel %vm479, 1, 0
          %v544 = vsel %vm480, 1, 0
          %v545 = vsel %vm481, 1, 0
          %v546 = vsel %vm482, 1, 0
          %v547 = vsel %vm483, 1, 0
          %v548 = vsel %vm484, 1, 0
          %v549 = vcvt.s32.f32 %v485
          %v550 = vcvt.s32.f32 %v486
          %v551 = vcvt.s32.f32 %v487
          %v552 = vcvt.s32.f32 %v488
          %v553 = vcvt.s32.f32 %v489
          %v554 = vcvt.s32.f32 %v490
          %v555 = vcvt.s32.f32 %v491
          %v556 = vcvt.s32.f32 %v492
          %v557 = vcvt.s32.f32 %v493
          %v558 = vcvt.s32.f32 %v494
          %v559 = vcvt.s32.f32 %v495
          %v560 = vcvt.s32.f32 %v496
          %v561 = vcvt.s32.f32 %v497
          %v562 = vcvt.s32.f32 %v498
          %v563 = vcvt.s32.f32 %v499
          %v564 = vcvt.s32.f32 %v500
          %v565 = vcvt.s32.f32 %v501
          %v566 = vcvt.s32.f32 %v502
          %v567 = vcvt.s32.f32 %v503
          %v568 = vcvt.s32.f32 %v504
          %v569 = vcvt.s32.f32 %v505
          %v570 = vcvt.s32.f32 %v506
          %v571 = vcvt.s32.f32 %v507
          %v572 = vcvt.s32.f32 %v508
          %v573 = vcvt.s32.f32 %v509
          %v574 = vcvt.s32.f32 %v510
          %v575 = vcvt.s32.f32 %v511
          %v576 = vcvt.s32.f32 %v512
          %v577 = vcvt.s32.f32 %v513
          %v578 = vcvt.s32.f32 %v514
          %v579 = vcvt.s32.f32 %v515
          %v580 = vcvt.s32.f32 %v516
          %v581 = vcvt.s32.f32 %v517
          %v582 = vcvt.s32.f32 %v518
          %v583 = vcvt.s32.f32 %v519
          %v584 = vcvt.s32.f32 %v520
          %v585 = vcvt.s32.f32 %v521
          %v586 = vcvt.s32.f32 %v522
          %v587 = vcvt.s32.f32 %v523
          %v588 = vcvt.s32.f32 %v524
          %v589 = vcvt.s32.f32 %v525
          %v590 = vcvt.s32.f32 %v526
          %v591 = vcvt.s32.f32 %v527
          %v592 = vcvt.s32.f32 %v528
          %v593 = vcvt.s32.f32 %v529
          %v594 = vcvt.s32.f32 %v530
          %v595 = vcvt.s32.f32 %v531
          %v596 = vcvt.s32.f32 %v532
          %v597 = vcvt.s32.f32 %v533
          %v598 = vcvt.s32.f32 %v534
          %v599 = vcvt.s32.f32 %v535
          %v600 = vcvt.s32.f32 %v536
          %v601 = vcvt.s32.f32 %v537
          %v602 = vcvt.s32.f32 %v538
          %v603 = vcvt.s32.f32 %v539
          %v604 = vcvt.s32.f32 %v540
          %v605 = vcvt.s32.f32 %v541
          %v606 = vcvt.s32.f32 %v542
          %v607 = vcvt.s32.f32 %v543
          %v608 = vcvt.s32.f32 %v544
          %v609 = vcvt.s32.f32 %v545
          %v610 = vcvt.s32.f32 %v546
          %v611 = vcvt.s32.f32 %v547
          %v612 = vcvt.s32.f32 %v548
          %v613 = vld [vmem:[%s295] sm:$0xff]
          %v614 = vld [vmem:[%s295 + $0x8] sm:$0xff]
          %v615 = vld [vmem:[%s295 + $0x10] sm:$0xff]
          %v616 = vld [vmem:[%s295 + $0x18] sm:$0xff]
          %617 = vmatprep.subr.mxu0 %v580
          %618 = vmatpush1.msra.mxu0 %v579
          %619 = vmatprep.subr.mxu0 %v578
          %620 = vmatpush1.msra.mxu0 %v577
          %621 = vmatprep.subr.mxu0 %v576
          %622 = vmatpush1.msra.mxu0 %v575
          %623 = vmatprep.subr.mxu0 %v574
          %624 = vmatpush1.msra.mxu0 %v573
          %625 = vmatprep.subr.mxu0 %v572
          %626 = vmatpush1.msra.mxu0 %v571
          %627 = vmatprep.subr.mxu0 %v570
          %628 = vmatpush1.msra.mxu0 %v569
          %629 = vmatprep.subr.mxu0 %v568
          %630 = vmatpush1.msra.mxu0 %v567
          %631 = vmatprep.subr.mxu0 %v566
          %632 = vmatpush1.msra.mxu0 %v565
          %633 = vmatprep.subr.mxu0 %v564
          %634 = vmatpush1.msra.mxu0 %v563
          %635 = vmatprep.subr.mxu0 %v562
          %636 = vmatpush1.msra.mxu0 %v561
          %637 = vmatprep.subr.mxu0 %v560
          %638 = vmatpush1.msra.mxu0 %v559
          %639 = vmatprep.subr.mxu0 %v558
          %640 = vmatpush1.msra.mxu0 %v557
          %641 = vmatprep.subr.mxu0 %v556
          %642 = vmatpush1.msra.mxu0 %v555
          %643 = vmatprep.subr.mxu0 %v554
          %644 = vmatpush1.msra.mxu0 %v553
          %645 = vmatprep.subr.mxu0 %v552
          %646 = vmatpush1.msra.mxu0 %v551
          %647 = vmatprep.subr.mxu0 %v550
          %648 = vmatpush1.msra.mxu0 %v549
          %649 = vmatprep.subr.mxu0 %v612
          %650 = vmatpush2.msra.mxu0 %v611
          %651 = vmatprep.subr.mxu0 %v610
          %652 = vmatpush2.msra.mxu0 %v609
          %653 = vmatprep.subr.mxu0 %v608
          %654 = vmatpush2.msra.mxu0 %v607
          %655 = vmatprep.subr.mxu0 %v606
          %656 = vmatpush2.msra.mxu0 %v605
          %657 = vmatprep.subr.mxu0 %v604
          %658 = vmatpush2.msra.mxu0 %v603
          %659 = vmatprep.subr.mxu0 %v602
          %660 = vmatpush2.msra.mxu0 %v601
          %661 = vmatprep.subr.mxu0 %v600
          %662 = vmatpush2.msra.mxu0 %v599
          %663 = vmatprep.subr.mxu0 %v598
          %664 = vmatpush2.msra.mxu0 %v597
          %665 = vmatprep.subr.mxu0 %v596
          %666 = vmatpush2.msra.mxu0 %v595
          %667 = vmatprep.subr.mxu0 %v594
          %668 = vmatpush2.msra.mxu0 %v593
          %669 = vmatprep.subr.mxu0 %v592
          %670 = vmatpush2.msra.mxu0 %v591
          %671 = vmatprep.subr.mxu0 %v590
          %672 = vmatpush2.msra.mxu0 %v589
          %673 = vmatprep.subr.mxu0 %v588
          %674 = vmatpush2.msra.mxu0 %v587
          %675 = vmatprep.subr.mxu0 %v586
          %676 = vmatpush2.msra.mxu0 %v585
          %677 = vmatprep.subr.mxu0 %v584
          %678 = vmatpush2.msra.mxu0 %v583
          %679 = vmatprep.subr.mxu0 %v582
          %680 = vmatpush2.msra.mxu0 %v581
          %681 = vmatprep.mubr.f32.mxu0 %v614
          %682 = vmatmul.mubr.f32.gmra.mxu0 %v613
          %v683 = vpop.f32.mrf.mxu0
          %v684 = vadd.f32 0.0, %v683
          %v685 = vpop.f32.mrf.mxu0
          %v686 = vadd.f32 0.0, %v685
          %687 = vmatprep.mubr.f32.mxu0 %v616
          %688 = vmatmul.mubr.f32.gmra.mxu0 %v615
          %v689 = vpop.f32.mrf.mxu0
          %v690 = vadd.f32 0.0, %v689
          %v691 = vpop.f32.mrf.mxu0
          %v692 = vadd.f32 0.0, %v691
          %693 = vdwg.mxu0
          %v694 = vld [vmem:[%s286] sm:$0xff]
          %v695 = vld [vmem:[#allocation2] sm:$0xff]
          %v697 = vlaneseq
          %v698 = vshrl.u32 %v697, 7
          %v699 = vsub.s32 0, %v698
          %v700 = vrot.slane %v694, %v699
          %v701 = vlaneseq
          %v702 = vshrl.u32 %v701, 7
          %v703 = vsub.s32 4, %v702
          %v704 = vrot.slane %v694, %v703
          %v707 = vlaneseq
          %v708 = vshrl.u32 %v707, 7
          %v709 = vsub.s32 0, %v708
          %v710 = vrot.slane %v700, %v709
          %v711 = vlaneseq
          %v712 = vshrl.u32 %v711, 7
          %v713 = vsub.s32 0, %v712
          %v714 = vrot.slane %v704, %v713
          %v715 = vmul.f32 %v710, %v684
          %v716 = vmul.f32 %v714, %v686
          %v717 = vlaneseq
          %v718 = vshrl.u32 %v717, 7
          %v719 = vsub.s32 1, %v718
          %v720 = vrot.slane %v694, %v719
          %v721 = vlaneseq
          %v722 = vshrl.u32 %v721, 7
          %v723 = vsub.s32 5, %v722
          %v724 = vrot.slane %v694, %v723
          %v727 = vlaneseq
          %v728 = vshrl.u32 %v727, 7
          %v729 = vsub.s32 1, %v728
          %v730 = vrot.slane %v720, %v729
          %v731 = vlaneseq
          %v732 = vshrl.u32 %v731, 7
          %v733 = vsub.s32 1, %v732
          %v734 = vrot.slane %v724, %v733
          %v735 = vmul.f32 %v730, %v684
          %v736 = vmul.f32 %v734, %v686
          %v739 = vrot.slane %v735, 4
          %v740 = vrot.slane %v736, 4
          %v743 = vadd.f32 %v715, %v739
          %v744 = vadd.f32 %v716, %v740
          %v745 = vlaneseq
          %v746 = vshrl.u32 %v745, 7
          %v747 = vsub.s32 2, %v746
          %v748 = vrot.slane %v694, %v747
          %v749 = vlaneseq
          %v750 = vshrl.u32 %v749, 7
          %v751 = vsub.s32 6, %v750
          %v752 = vrot.slane %v694, %v751
          %v755 = vlaneseq
          %v756 = vshrl.u32 %v755, 7
          %v757 = vsub.s32 2, %v756
          %v758 = vrot.slane %v748, %v757
          %v759 = vlaneseq
          %v760 = vshrl.u32 %v759, 7
          %v761 = vsub.s32 2, %v760
          %v762 = vrot.slane %v752, %v761
          %v763 = vmul.f32 %v758, %v690
          %v764 = vmul.f32 %v762, %v692
          %v765 = vadd.f32 %v743, %v763
          %v766 = vadd.f32 %v744, %v764
          %v767 = vlaneseq
          %v768 = vshrl.u32 %v767, 7
          %v769 = vsub.s32 3, %v768
          %v770 = vrot.slane %v694, %v769
          %v771 = vlaneseq
          %v772 = vshrl.u32 %v771, 7
          %v773 = vsub.s32 7, %v772
          %v774 = vrot.slane %v694, %v773
          %v777 = vlaneseq
          %v778 = vshrl.u32 %v777, 7
          %v779 = vsub.s32 3, %v778
          %v780 = vrot.slane %v770, %v779
          %v781 = vlaneseq
          %v782 = vshrl.u32 %v781, 7
          %v783 = vsub.s32 3, %v782
          %v784 = vrot.slane %v774, %v783
          %v785 = vmul.f32 %v780, %v690
          %v786 = vmul.f32 %v784, %v692
          %v789 = vrot.slane %v785, 4
          %v790 = vrot.slane %v786, 4
          %v793 = vadd.f32 %v765, %v789
          %v794 = vadd.f32 %v766, %v790
          %v797 = vcombine.low %v793, %v794
          %v799 = vadd.f32 %v695, %v797
          %800 = vst [vmem:[#allocation2] sm:$0xff] %v799
        $region48: #{tpu_custom_call.1} parent=31 // pred_fallthru
          _
        // Predicated region
        $region49: #{tpu_custom_call.1} parent=31 // pred_check
          %p801 = pneg %p356
        $region50: #{tpu_custom_call.1} parent=31 // pred_check_branch
          %803 = sbr.rel (%p801) target = $region52
        $region51: #{tpu_custom_call.1} parent=31 // pred_region
          %v804 = vld [vmem:[#allocation2] sm:$0xff]
          %805 = vst [vmem:[%s330] sm:$0xff] %v804
        $region52: #{tpu_custom_call.1} parent=31 // pred_fallthru
          _
        %s806 = sand.u32 %s174, 1
        %s807 = scalar_lea.sflag [#allocation8], %s806
        %s808 = sand.u32 %s174, 1
        %s809 = smul.addr %s808, 8
        %s810 = scalar_lea.vmem [#allocation11], %s809
        // Predicated region
        $region53: #{tpu_custom_call.1} parent=31 // pred_check
          %p811 = pneg %p184
        $region54: #{tpu_custom_call.1} parent=31 // pred_check_branch
          %813 = sbr.rel (%p811) target = $region56
        $region55: #{tpu_custom_call.1} parent=31 // pred_region
          %s814 = smul.u32 2, %s41
          %s816 = ssub.s32 128, 128
          %817 = vsyncadd %s807, %s816
          %s818 = smul.addr %s40, 2
          %s819 = sadd.s32 %s814, %s818
          %s820 = smul.addr %s819, 64
          %s821 = scalar_lea.hbm %s5, %s820
          %s823 = sshll.u32 %s810, 4
          %s824 = int_to_ptr.vmem [resolvable:$true] %s823
          %826 = dma.vmem_to_hbm [thread:$0]  %s824, 128, %s821, %s807
        $region56: #{tpu_custom_call.1} parent=31 // pred_fallthru
          _
      $region32: #{tpu_custom_call.1} parent=5 // pred_fallthru
        _
      %p827 = scmp.le.s32.totalorder 2, %s30
      // Predicated region
      $region57: #{tpu_custom_call.1} parent=5 // pred_check
        %p828 = pneg %p827
      $region58: #{tpu_custom_call.1} parent=5 // pred_check_branch
        %830 = sbr.rel (%p828) target = $region60
      $region59: #{tpu_custom_call.1} parent=5 // pred_region
        %s831 = ssub.s32 %s30, 2
        // Predicated region
        $region61: #{tpu_custom_call.1} parent=59 // pred_check
          %p832 = pneg %p190
        $region62: #{tpu_custom_call.1} parent=59 // pred_check_branch
          %834 = sbr.rel (%p832) target = $region64
        $region63: #{tpu_custom_call.1} parent=59 // pred_region
          %s835 = sand.u32 %s175, 1
          %s836 = scalar_lea.sflag [#allocation8], %s835
          %s837 = sand.u32 %s175, 1
          %s838 = smul.addr %s837, 8
          %s839 = scalar_lea.vmem [#allocation11], %s838
          %840 = dma.done %s836, 128
        $region64: #{tpu_custom_call.1} parent=59 // pred_fallthru
          _
      $region60: #{tpu_custom_call.1} parent=5 // pred_fallthru
        _
    $region6: #{tpu_custom_call.1} parent=1 // loop_footer
      %s34 = sadd.s32 1, %s30
    $region7: #{tpu_custom_call.1} parent=1 // loop_footer_branch
      %29 = sbr.rel target = $region3
    $region8: #{tpu_custom_call.1} parent=1 // loop_exit
      _
    %841 = vsyncpa [#allocation7], 1
    %s842 = scalar_lea.sflag [#allocation7], 1
    %843 = vsyncpa %s842, 1
    %844 = vsyncpa [#allocation10], 1
    %s845 = scalar_lea.sflag [#allocation10], 1
    %846 = vsyncpa %s845, 1
    %847 = vsyncpa [#allocation8], 1
    %s848 = scalar_lea.sflag [#allocation8], 1
    %849 = vsyncpa %s848, 1

</llo_original>
